<compile_context>
chip_gen: v5e
topology: v5e:2x2
jax: 0.10.0
libtpu: 0.0.40
codegen_flags: <defaults>
</compile_context>

<pallas_src>
import jax
import jax.numpy as jnp
from jax.experimental import pallas as pl
from jax.experimental.pallas import tpu as pltpu


def discriminator_mlp_kernel(gen_ref, cond_ref, w1g_ref, w1c_ref, b1_ref,
                             w2_ref, b2_ref, w3_ref, b3_ref, o_ref):
    # Layer 1: fused concat -> split-K matmul: h1 = [gen | cond] @ w1 + b1, LeakyReLU(0.2)
    h1 = (jnp.dot(gen_ref[...], w1g_ref[...], preferred_element_type=jnp.float32)
          + jnp.dot(cond_ref[...], w1c_ref[...], preferred_element_type=jnp.float32)
          + b1_ref[...])
    h1 = jnp.maximum(h1, 0.2 * h1)

    # Layer 2: Linear -> Dropout(0.4) -> LeakyReLU(0.2)
    # TODO(synk): Dropout(0.4) is identity in eval mode; training-mode dropout not implemented.
    h2 = jnp.dot(h1.astype(jnp.bfloat16), w2_ref[...],
                 preferred_element_type=jnp.float32) + b2_ref[...]
    h2 = jnp.maximum(h2, 0.2 * h2)

    # Layer 3: Linear -> validity logits (padded to 8 lanes; first n_out are real)
    out = jnp.dot(h2.astype(jnp.bfloat16), w3_ref[...],
                  preferred_element_type=jnp.float32) + b3_ref[...]
    o_ref[...] = out.astype(o_ref.dtype)


def _round_up(x, m):
    return ((x + m - 1) // m) * m


def prepare_discriminator_params(params, f_gen):
    """One-time weight prep (hoisted out of the forward pass):
    split w1 rows to fuse the concat, cast matmul weights to bf16, pad layer-3 to 8 cols."""
    w1, b1, w2, b2, w3, b3 = params
    n_out = w3.shape[1]
    out_pad = max(8, _round_up(n_out, 8))

    w1g = w1[:f_gen].astype(jnp.bfloat16)
    w1c = w1[f_gen:].astype(jnp.bfloat16)
    w2b = w2.astype(jnp.bfloat16)
    w3p = jnp.zeros((w2.shape[1], out_pad), jnp.float32).at[:, :n_out].set(w3).astype(jnp.bfloat16)
    b3p = jnp.zeros((1, out_pad), jnp.float32).at[:, :n_out].set(b3)

    prepped = (w1g, w1c, b1.astype(jnp.float32), w2b, b2.astype(jnp.float32), w3p, b3p)
    return prepped, n_out


def discriminator_forward(gen_output, cond_data, prepped, n_out, *, block_b=4096):
    """gen_output: [B, output_len, num_classes]; cond_data: [B, C_compressed*output_len].
    `prepped` comes from prepare_discriminator_params()."""
    B = gen_output.shape[0]
    gen_flat = gen_output.reshape(B, -1).astype(jnp.bfloat16)
    cond = cond_data.astype(jnp.bfloat16)
    F_gen = gen_flat.shape[1]
    F_cond = cond.shape[1]

    w1g, w1c, b1, w2b, b2, w3p, b3p = prepped
    H1 = w1g.shape[1]
    H2 = w2b.shape[1]
    OUT_PAD = w3p.shape[1]

    # Batch tiling. Alignment 16 rows (bf16 sublane packing). Aim for >= 2 grid steps for
    # moderate batches so v7x megacore actually shards the "parallel" axis.
    ALIGN = 16
    b_aligned = _round_up(B, ALIGN)
    half = _round_up((b_aligned + 1) // 2, ALIGN)
    TB = max(ALIGN, min(block_b, half))
    B_pad = _round_up(B, TB)
    if B_pad != B:
        gen_flat = jnp.pad(gen_flat, ((0, B_pad - B), (0, 0)))
        cond = jnp.pad(cond, ((0, B_pad - B), (0, 0)))

    const = lambda i: (0, 0)
    out = pl.pallas_call(
        discriminator_mlp_kernel,
        out_shape=jax.ShapeDtypeStruct((B_pad, OUT_PAD), jnp.float32),
        grid_spec=pltpu.PrefetchScalarGridSpec(
            num_scalar_prefetch=0,
            grid=(B_pad // TB,),
            in_specs=[
                pl.BlockSpec((TB, F_gen), lambda i: (i, 0)),
                pl.BlockSpec((TB, F_cond), lambda i: (i, 0)),
                pl.BlockSpec((F_gen, H1), const),
                pl.BlockSpec((F_cond, H1), const),
                pl.BlockSpec((1, H1), const),
                pl.BlockSpec((H1, H2), const),
                pl.BlockSpec((1, H2), const),
                pl.BlockSpec((H2, OUT_PAD), const),
                pl.BlockSpec((1, OUT_PAD), const),
            ],
            out_specs=pl.BlockSpec((TB, OUT_PAD), lambda i: (i, 0)),
        ),
        compiler_params=pltpu.CompilerParams(
            dimension_semantics=("parallel",),
            vmem_limit_bytes=32 * 1024 * 1024,
        ),
    )(gen_flat, cond, w1g, w1c, b1, w2b, b2, w3p, b3p)

    return out[:B, :n_out]


def init_params(key, in_features, hidden1, hidden2, out_features):
    """Deterministic init mimicking PyTorch nn.Linear default (uniform +-1/sqrt(fan_in)).
    Weights are returned already transposed to [in, out]."""
    ks = jax.random.split(key, 6)

    def linear(kw, kb, fan_in, fan_out):
        bound = 1.0 / jnp.sqrt(jnp.asarray(fan_in, jnp.float32))
        w = jax.random.uniform(kw, (fan_in, fan_out), jnp.float32, -bound, bound)
        b = jax.random.uniform(kb, (1, fan_out), jnp.float32, -bound, bound)
        return w, b

    w1, b1 = linear(ks[0], ks[1], in_features, hidden1)
    w2, b2 = linear(ks[2], ks[3], hidden1, hidden2)
    w3, b3 = linear(ks[4], ks[5], hidden2, out_features)
    return (w1, b1, w2, b2, w3, b3)


def discriminator_reference(gen_output, cond_data, params):
    """Pure-JAX f32 reference (eval mode), mirroring the PyTorch module."""
    B = gen_output.shape[0]
    d_in = jnp.concatenate([gen_output.reshape(B, -1), cond_data], axis=-1)
    w1, b1, w2, b2, w3, b3 = params
    h1 = d_in @ w1 + b1
    h1 = jnp.where(h1 > 0, h1, 0.2 * h1)
    h2 = h1 @ w2 + b2
    h2 = jnp.where(h2 > 0, h2, 0.2 * h2)
    return h2 @ w3 + b3


if __name__ == "__main__":
    # Small shapes consistent with the module:
    #   output_len=8, num_classes=4, in_channels (unused in forward) = 4, compressed_channels=16
    B = 2
    output_len = 8
    num_classes = 4
    compressed_channels = 16

    output_feature_num = output_len * num_classes                        # 32
    in_features = compressed_channels * output_len + output_feature_num  # 160
    hidden1 = 4 * output_feature_num                                     # 128
    hidden2 = output_feature_num                                         # 32

    key = jax.random.PRNGKey(0)
    k_go, k_cd, k_p = jax.random.split(key, 3)

    # gen_output in one-hot-like format [B, output_len, num_classes]
    gen_output = jax.random.normal(k_go, (B, output_len, num_classes), jnp.float32)
    # cond_data: compressed features [B, compressed_channels * output_len]
    cond_data = jax.random.normal(k_cd, (B, compressed_channels * output_len), jnp.float32)

    params = init_params(k_p, in_features, hidden1, hidden2, 2)

    # One-time weight prep (done once, reused across forwards).
    prepped, n_out = prepare_discriminator_params(params, output_feature_num)
    prepped = jax.tree.map(jax.block_until_ready, prepped)

    validity = discriminator_forward(gen_output, cond_data, prepped, n_out)
    jax.block_until_ready(validity)

    assert validity.shape == (B, 2), validity.shape

    # Loose check vs f32 reference (kernel uses bf16 MXU operands, f32 accumulation).
    ref = discriminator_reference(gen_output, cond_data, params)
    assert jnp.allclose(validity, ref, rtol=0.1, atol=0.1), (validity, ref)

    print("KERNEL_OK")
</pallas_src>

<mosaic_0001>
module attributes {stable_mosaic.version = 11 : i64} {
  func.func @discriminator_mlp_kernel(%arg0: i32, %arg1: memref<16x32xbf16, #tpu.memory_space<vmem>>, %arg2: memref<16x128xbf16, #tpu.memory_space<vmem>>, %arg3: memref<32x128xbf16, #tpu.memory_space<vmem>>, %arg4: memref<128x128xbf16, #tpu.memory_space<vmem>>, %arg5: memref<1x128xf32, #tpu.memory_space<vmem>>, %arg6: memref<128x32xbf16, #tpu.memory_space<vmem>>, %arg7: memref<1x32xf32, #tpu.memory_space<vmem>>, %arg8: memref<32x8xbf16, #tpu.memory_space<vmem>>, %arg9: memref<1x8xf32, #tpu.memory_space<vmem>>, %arg10: memref<16x8xf32, #tpu.memory_space<vmem>>) attributes {dimension_semantics = [#tpu.dimension_semantics<parallel>], iteration_bounds = array<i64: 1>, scalar_prefetch = 0 : i64, scratch_operands = 0 : i64, tpu.core_type = #tpu.core_type<tc>, window_params = [{transform_indices = @transform_0, window_bounds = array<i64: 16, 32>}, {transform_indices = @transform_1, window_bounds = array<i64: 16, 128>}, {pipeline_mode = #tpu.pipeline_mode<synchronous>, transform_indices = @transform_2, window_bounds = array<i64: 32, 128>}, {pipeline_mode = #tpu.pipeline_mode<synchronous>, transform_indices = @transform_3, window_bounds = array<i64: 128, 128>}, {pipeline_mode = #tpu.pipeline_mode<synchronous>, transform_indices = @transform_4, window_bounds = array<i64: 1, 128>}, {pipeline_mode = #tpu.pipeline_mode<synchronous>, transform_indices = @transform_5, window_bounds = array<i64: 128, 32>}, {pipeline_mode = #tpu.pipeline_mode<synchronous>, transform_indices = @transform_6, window_bounds = array<i64: 1, 32>}, {pipeline_mode = #tpu.pipeline_mode<synchronous>, transform_indices = @transform_7, window_bounds = array<i64: 32, 8>}, {pipeline_mode = #tpu.pipeline_mode<synchronous>, transform_indices = @transform_8, window_bounds = array<i64: 1, 8>}, {transform_indices = @transform_9, window_bounds = array<i64: 16, 8>}]} {
    %c0 = arith.constant 0 : index
    %c0_0 = arith.constant 0 : index
    %0 = vector.load %arg1[%c0, %c0_0] : memref<16x32xbf16, #tpu.memory_space<vmem>>, vector<16x32xbf16>
    %c0_1 = arith.constant 0 : index
    %c0_2 = arith.constant 0 : index
    %1 = vector.load %arg3[%c0_1, %c0_2] : memref<32x128xbf16, #tpu.memory_space<vmem>>, vector<32x128xbf16>
    %cst = arith.constant dense<0.000000e+00> : vector<16x128xf32>
    %2 = tpu.matmul %0, %1, %cst {dimension_numbers = #tpu.dot_dimension_numbers<[1], [0], [0], [1], [0, 0, 1, 1], [], []>} : vector<16x32xbf16>, vector<32x128xbf16>, vector<16x128xf32> -> vector<16x128xf32>
    %c0_3 = arith.constant 0 : index
    %c0_4 = arith.constant 0 : index
    %3 = vector.load %arg2[%c0_3, %c0_4] : memref<16x128xbf16, #tpu.memory_space<vmem>>, vector<16x128xbf16>
    %c0_5 = arith.constant 0 : index
    %c0_6 = arith.constant 0 : index
    %4 = vector.load %arg4[%c0_5, %c0_6] : memref<128x128xbf16, #tpu.memory_space<vmem>>, vector<128x128xbf16>
    %cst_7 = arith.constant dense<0.000000e+00> : vector<16x128xf32>
    %5 = tpu.matmul %3, %4, %cst_7 {dimension_numbers = #tpu.dot_dimension_numbers<[1], [0], [0], [1], [0, 0, 1, 1], [], []>} : vector<16x128xbf16>, vector<128x128xbf16>, vector<16x128xf32> -> vector<16x128xf32>
    %6 = arith.addf %2, %5 : vector<16x128xf32>
    %c0_8 = arith.constant 0 : index
    %c0_9 = arith.constant 0 : index
    %7 = vector.load %arg5[%c0_8, %c0_9] : memref<1x128xf32, #tpu.memory_space<vmem>>, vector<1x128xf32>
    %8 = vector.broadcast %7 : vector<1x128xf32> to vector<16x128xf32>
    %9 = arith.addf %6, %8 : vector<16x128xf32>
    %cst_10 = arith.constant 2.000000e-01 : f32
    %10 = vector.broadcast %cst_10 : f32 to vector<16x128xf32>
    %11 = arith.mulf %10, %9 : vector<16x128xf32>
    %12 = arith.maximumf %9, %11 : vector<16x128xf32>
    %13 = arith.truncf %12 : vector<16x128xf32> to vector<16x128xbf16>
    %c0_11 = arith.constant 0 : index
    %c0_12 = arith.constant 0 : index
    %14 = vector.load %arg6[%c0_11, %c0_12] : memref<128x32xbf16, #tpu.memory_space<vmem>>, vector<128x32xbf16>
    %cst_13 = arith.constant dense<0.000000e+00> : vector<16x32xf32>
    %15 = tpu.matmul %13, %14, %cst_13 {dimension_numbers = #tpu.dot_dimension_numbers<[1], [0], [0], [1], [0, 0, 1, 1], [], []>} : vector<16x128xbf16>, vector<128x32xbf16>, vector<16x32xf32> -> vector<16x32xf32>
    %c0_14 = arith.constant 0 : index
    %c0_15 = arith.constant 0 : index
    %16 = vector.load %arg7[%c0_14, %c0_15] : memref<1x32xf32, #tpu.memory_space<vmem>>, vector<1x32xf32>
    %17 = vector.broadcast %16 : vector<1x32xf32> to vector<16x32xf32>
    %18 = arith.addf %15, %17 : vector<16x32xf32>
    %cst_16 = arith.constant 2.000000e-01 : f32
    %19 = vector.broadcast %cst_16 : f32 to vector<16x32xf32>
    %20 = arith.mulf %19, %18 : vector<16x32xf32>
    %21 = arith.maximumf %18, %20 : vector<16x32xf32>
    %22 = arith.truncf %21 : vector<16x32xf32> to vector<16x32xbf16>
    %c0_17 = arith.constant 0 : index
    %c0_18 = arith.constant 0 : index
    %23 = vector.load %arg8[%c0_17, %c0_18] : memref<32x8xbf16, #tpu.memory_space<vmem>>, vector<32x8xbf16>
    %cst_19 = arith.constant dense<0.000000e+00> : vector<16x8xf32>
    %24 = tpu.matmul %22, %23, %cst_19 {dimension_numbers = #tpu.dot_dimension_numbers<[1], [0], [0], [1], [0, 0, 1, 1], [], []>} : vector<16x32xbf16>, vector<32x8xbf16>, vector<16x8xf32> -> vector<16x8xf32>
    %c0_20 = arith.constant 0 : index
    %c0_21 = arith.constant 0 : index
    %25 = vector.load %arg9[%c0_20, %c0_21] : memref<1x8xf32, #tpu.memory_space<vmem>>, vector<1x8xf32>
    %26 = vector.broadcast %25 : vector<1x8xf32> to vector<16x8xf32>
    %27 = arith.addf %24, %26 : vector<16x8xf32>
    %c0_22 = arith.constant 0 : index
    %c0_23 = arith.constant 0 : index
    %28 = vector.load %arg10[%c0_22, %c0_23] : memref<16x8xf32, #tpu.memory_space<vmem>>, vector<16x8xf32>
    tpu.vector_store %arg10[%c0_22, %c0_23], %27 {strides = array<i32>} : memref<16x8xf32, #tpu.memory_space<vmem>>, vector<16x8xf32>,
    return
  }
  func.func @transform_0(%arg0: i32) -> (i32, i32) {
    %c0_i32 = arith.constant 0 : i32
    %c0_i32_0 = arith.constant 0 : i32
    return %arg0, %c0_i32 : i32, i32
  }
  func.func @transform_1(%arg0: i32) -> (i32, i32) {
    %c0_i32 = arith.constant 0 : i32
    %c0_i32_0 = arith.constant 0 : i32
    return %arg0, %c0_i32 : i32, i32
  }
  func.func @transform_2(%arg0: i32) -> (i32, i32) {
    %c0_i32 = arith.constant 0 : i32
    %c0_i32_0 = arith.constant 0 : i32
    %c0_i32_1 = arith.constant 0 : i32
    return %c0_i32, %c0_i32_0 : i32, i32
  }
  func.func @transform_3(%arg0: i32) -> (i32, i32) {
    %c0_i32 = arith.constant 0 : i32
    %c0_i32_0 = arith.constant 0 : i32
    %c0_i32_1 = arith.constant 0 : i32
    return %c0_i32, %c0_i32_0 : i32, i32
  }
  func.func @transform_4(%arg0: i32) -> (i32, i32) {
    %c0_i32 = arith.constant 0 : i32
    %c0_i32_0 = arith.constant 0 : i32
    %c0_i32_1 = arith.constant 0 : i32
    return %c0_i32, %c0_i32_0 : i32, i32
  }
  func.func @transform_5(%arg0: i32) -> (i32, i32) {
    %c0_i32 = arith.constant 0 : i32
    %c0_i32_0 = arith.constant 0 : i32
    %c0_i32_1 = arith.constant 0 : i32
    return %c0_i32, %c0_i32_0 : i32, i32
  }
  func.func @transform_6(%arg0: i32) -> (i32, i32) {
    %c0_i32 = arith.constant 0 : i32
    %c0_i32_0 = arith.constant 0 : i32
    %c0_i32_1 = arith.constant 0 : i32
    return %c0_i32, %c0_i32_0 : i32, i32
  }
  func.func @transform_7(%arg0: i32) -> (i32, i32) {
    %c0_i32 = arith.constant 0 : i32
    %c0_i32_0 = arith.constant 0 : i32
    %c0_i32_1 = arith.constant 0 : i32
    return %c0_i32, %c0_i32_0 : i32, i32
  }
  func.func @transform_8(%arg0: i32) -> (i32, i32) {
    %c0_i32 = arith.constant 0 : i32
    %c0_i32_0 = arith.constant 0 : i32
    %c0_i32_1 = arith.constant 0 : i32
    return %c0_i32, %c0_i32_0 : i32, i32
  }
  func.func @transform_9(%arg0: i32) -> (i32, i32) {
    %c0_i32 = arith.constant 0 : i32
    %c0_i32_0 = arith.constant 0 : i32
    return %arg0, %c0_i32 : i32, i32
  }
}

</mosaic_0001>

<llo_original>
// kernel: tpu_custom_call.1
$region0: #{tpu_custom_call.1}
  #allocation0 [shape = 'u32[]', space=smem, size = 0x4, offset = 0x4, fixed_abs, tag = 'smem constant byte address 0x4 - core index']
  #allocation1 [shape = 'u32[72,128]{1,0:T(1,128)}', space=vmem, size = 0x9000, scoped, tag = 'internal scratch']
  %s0 = inlined_call_operand.hbm [shape: bf16[16,32], index: 0, kind: input, shape index: {}]
  %s1 = inlined_call_operand.hbm [shape: bf16[16,128], index: 1, kind: input, shape index: {}]
  %s2 = inlined_call_operand.vmem [shape: bf16[32,128], index: 2, kind: input, shape index: {}]
  %s3 = inlined_call_operand.vmem [shape: bf16[128,128], index: 3, kind: input, shape index: {}]
  %s4 = inlined_call_operand.vmem [shape: f32[1,128], index: 4, kind: input, shape index: {}]
  %s5 = inlined_call_operand.vmem [shape: bf16[128,32], index: 5, kind: input, shape index: {}]
  %s6 = inlined_call_operand.vmem [shape: f32[1,32], index: 6, kind: input, shape index: {}]
  %s7 = inlined_call_operand.vmem [shape: bf16[32,8], index: 7, kind: input, shape index: {}]
  %s8 = inlined_call_operand.vmem [shape: f32[1,8], index: 8, kind: input, shape index: {}]
  %s9 = inlined_call_operand.vmem [shape: f32[16,8], index: 9, kind: output, shape index: {}]
  %s10 = sld [smem:[#allocation0]]
  $region54: #{tpu_custom_call.1} parent=0
    _
  %s12 = ssub.s32 1, %s10
  %s13 = scalar_select 0, %s12, %s10
  $region1: #{tpu_custom_call.1} parent=0
    #allocation2 [shape = 'u8[4096]{0}', space=vmem, size = 0x1000, scoped, tag = 'input window, operand 0, single buffered']
    #allocation3 [shape = 's32[1]{0}', space=sflag, size = 0x4, scoped, tag = 'scoped memory for tpu_custom_call.1']
    #allocation4 [shape = 'u8[4096]{0}', space=vmem, size = 0x1000, scoped, tag = 'input window, operand 1, single buffered']
    #allocation5 [shape = 's32[1]{0}', space=sflag, size = 0x4, scoped, tag = 'scoped memory for tpu_custom_call.1']
    %14 = vsyncpa [#allocation3], 0
    %15 = vsyncpa [#allocation5], 0
    // Predicated region
    $region2: #{tpu_custom_call.1} parent=1 // pred_check
      _
    $region3: #{tpu_custom_call.1} parent=1 // pred_check_branch
      %17 = sbr.rel (0) target = $region5
    $region4: #{tpu_custom_call.1} parent=1 // pred_region
      %19 = vsyncadd [#allocation3], 0
      %s20 = sshll.u32 %s0, 4
      %s21 = int_to_ptr.hbm [resolvable:$true] %s20
      %s22 = sshll.u32 [#allocation2], 4
      %s23 = int_to_ptr.vmem [resolvable:$true] %s22
      %28 = dma.hbm_to_vmem [thread:$0]  %s21, 128, %s23, [#allocation3], 64, 64, 4
    $region5: #{tpu_custom_call.1} parent=1 // pred_fallthru
      _
    // Predicated region
    $region6: #{tpu_custom_call.1} parent=1 // pred_check
      _
    $region7: #{tpu_custom_call.1} parent=1 // pred_check_branch
      %30 = sbr.rel (0) target = $region9
    $region8: #{tpu_custom_call.1} parent=1 // pred_region
      %32 = vsyncadd [#allocation5], 0
      %s33 = sshll.u32 %s1, 4
      %s34 = int_to_ptr.hbm [resolvable:$true] %s33
      %s35 = sshll.u32 [#allocation4], 4
      %s36 = int_to_ptr.vmem [resolvable:$true] %s35
      %41 = dma.hbm_to_vmem [thread:$0]  %s34, 128, %s36, [#allocation5], 64, 64, 4
    $region9: #{tpu_custom_call.1} parent=1 // pred_fallthru
      _
    // Predicated region
    $region10: #{tpu_custom_call.1} parent=1 // pred_check
      _
    $region11: #{tpu_custom_call.1} parent=1 // pred_check_branch
      %43 = sbr.rel (0) target = $region13
    $region12: #{tpu_custom_call.1} parent=1 // pred_region
      _
    $region13: #{tpu_custom_call.1} parent=1 // pred_fallthru
      _
    // Predicated region
    $region14: #{tpu_custom_call.1} parent=1 // pred_check
      _
    $region15: #{tpu_custom_call.1} parent=1 // pred_check_branch
      %45 = sbr.rel (0) target = $region17
    $region16: #{tpu_custom_call.1} parent=1 // pred_region
      _
    $region17: #{tpu_custom_call.1} parent=1 // pred_fallthru
      _
    // Predicated region
    $region18: #{tpu_custom_call.1} parent=1 // pred_check
      _
    $region19: #{tpu_custom_call.1} parent=1 // pred_check_branch
      %47 = sbr.rel (0) target = $region21
    $region20: #{tpu_custom_call.1} parent=1 // pred_region
      _
    $region21: #{tpu_custom_call.1} parent=1 // pred_fallthru
      _
    // Predicated region
    $region22: #{tpu_custom_call.1} parent=1 // pred_check
      _
    $region23: #{tpu_custom_call.1} parent=1 // pred_check_branch
      %49 = sbr.rel (0) target = $region25
    $region24: #{tpu_custom_call.1} parent=1 // pred_region
      _
    $region25: #{tpu_custom_call.1} parent=1 // pred_fallthru
      _
    // Predicated region
    $region26: #{tpu_custom_call.1} parent=1 // pred_check
      _
    $region27: #{tpu_custom_call.1} parent=1 // pred_check_branch
      %51 = sbr.rel (0) target = $region29
    $region28: #{tpu_custom_call.1} parent=1 // pred_region
      _
    $region29: #{tpu_custom_call.1} parent=1 // pred_fallthru
      _
    // Predicated region
    $region30: #{tpu_custom_call.1} parent=1 // pred_check
      _
    $region31: #{tpu_custom_call.1} parent=1 // pred_check_branch
      %53 = sbr.rel (0) target = $region33
    $region32: #{tpu_custom_call.1} parent=1 // pred_region
      _
    $region33: #{tpu_custom_call.1} parent=1 // pred_fallthru
      _
    // Predicated region
    $region34: #{tpu_custom_call.1} parent=1 // pred_check
      _
    $region35: #{tpu_custom_call.1} parent=1 // pred_check_branch
      %55 = sbr.rel (0) target = $region37
    $region36: #{tpu_custom_call.1} parent=1 // pred_region
      _
    $region37: #{tpu_custom_call.1} parent=1 // pred_fallthru
      _
    // Predicated region
    $region38: #{tpu_custom_call.1} parent=1 // pred_check
      _
    $region39: #{tpu_custom_call.1} parent=1 // pred_check_branch
      %57 = sbr.rel (0) target = $region41
    $region40: #{tpu_custom_call.1} parent=1 // pred_region
      %59 = dma.done [#allocation3], 128
    $region41: #{tpu_custom_call.1} parent=1 // pred_fallthru
      _
    // Predicated region
    $region42: #{tpu_custom_call.1} parent=1 // pred_check
      _
    $region43: #{tpu_custom_call.1} parent=1 // pred_check_branch
      %61 = sbr.rel (0) target = $region45
    $region44: #{tpu_custom_call.1} parent=1 // pred_region
      %63 = dma.done [#allocation5], 128
    $region45: #{tpu_custom_call.1} parent=1 // pred_fallthru
      _
    %v65 = vld [vmem:[#allocation2] sm:$0xf]
    %v66 = vld [vmem:[#allocation2 + $0x4] sm:$0xf]
    %v67 = vld [vmem:[%s2] sm:$0xf]
    %v68 = vld [vmem:[%s2 + $0x4] sm:$0xf]
    %v69 = vld [vmem:[%s2 + $0x8] sm:$0xf]
    %v70 = vld [vmem:[%s2 + $0xc] sm:$0xf]
    %v71 = vld [vmem:[#allocation4] sm:$0xf]
    %v72 = vld [vmem:[#allocation4 + $0x4] sm:$0xf]
    %v73 = vld [vmem:[%s3] sm:$0xf]
    %v74 = vld [vmem:[%s3 + $0x4] sm:$0xf]
    %v75 = vld [vmem:[%s3 + $0x8] sm:$0xf]
    %v76 = vld [vmem:[%s3 + $0xc] sm:$0xf]
    %v77 = vld [vmem:[%s3 + $0x10] sm:$0xf]
    %v78 = vld [vmem:[%s3 + $0x14] sm:$0xf]
    %v79 = vld [vmem:[%s3 + $0x18] sm:$0xf]
    %v80 = vld [vmem:[%s3 + $0x1c] sm:$0xf]
    %v81 = vld [vmem:[%s3 + $0x20] sm:$0xf]
    %v82 = vld [vmem:[%s3 + $0x24] sm:$0xf]
    %v83 = vld [vmem:[%s3 + $0x28] sm:$0xf]
    %v84 = vld [vmem:[%s3 + $0x2c] sm:$0xf]
    %v85 = vld [vmem:[%s3 + $0x30] sm:$0xf]
    %v86 = vld [vmem:[%s3 + $0x34] sm:$0xf]
    %v87 = vld [vmem:[%s3 + $0x38] sm:$0xf]
    %v88 = vld [vmem:[%s3 + $0x3c] sm:$0xf]
    %v91 = vunpack.c.l.b16 %v71
    %v92 = vunpack.c.l.b16 %v72
    %v93 = vpack.c.b16 %v92, %v91
    %v111 = vunpack.c.l.b16 %v73
    %v112 = vunpack.c.l.b16 %v74
    %v113 = vunpack.c.l.b16 %v75
    %v114 = vunpack.c.l.b16 %v76
    %v115 = vunpack.c.l.b16 %v77
    %v116 = vunpack.c.l.b16 %v78
    %v117 = vunpack.c.l.b16 %v79
    %v118 = vunpack.c.l.b16 %v80
    %v119 = vunpack.c.l.b16 %v81
    %v120 = vunpack.c.l.b16 %v82
    %v121 = vunpack.c.l.b16 %v83
    %v122 = vunpack.c.l.b16 %v84
    %v123 = vunpack.c.l.b16 %v85
    %v124 = vunpack.c.l.b16 %v86
    %v125 = vunpack.c.l.b16 %v87
    %v126 = vunpack.c.l.b16 %v88
    %v127 = vpack.c.b16 %v112, %v111
    %v128 = vpack.c.b16 %v114, %v113
    %v129 = vpack.c.b16 %v116, %v115
    %v130 = vpack.c.b16 %v118, %v117
    %v131 = vpack.c.b16 %v120, %v119
    %v132 = vpack.c.b16 %v122, %v121
    %v133 = vpack.c.b16 %v124, %v123
    %v134 = vpack.c.b16 %v126, %v125
    %143 = vmatpush.bf16.msra.mxu0 %v134
    %144 = vmatpush.bf16.msra.mxu0 %v133
    %145 = vmatpush.bf16.msra.mxu0 %v132
    %146 = vmatpush.bf16.msra.mxu0 %v131
    %147 = vmatpush.bf16.msra.mxu0 %v130
    %148 = vmatpush.bf16.msra.mxu0 %v129
    %149 = vmatpush.bf16.msra.mxu0 %v128
    %150 = vmatpush.bf16.msra.mxu0 %v127
    %151 = vmatmul.bf16.gmra.mxu0 %v93
    %v152 = vpop.f32.mrf.mxu0
    %v153 = vadd.f32 0.0, %v152
    %v154 = vpop.f32.mrf.mxu0
    %v155 = vadd.f32 0.0, %v154
    %156 = vdwg.mxu0
    %v159 = vunpack.c.l.b16 %v65
    %v160 = vunpack.c.l.b16 %v66
    %v161 = vpack.c.b16 %v160, %v159
    %v166 = vunpack.c.l.b16 %v67
    %v167 = vunpack.c.l.b16 %v68
    %v168 = vunpack.c.l.b16 %v69
    %v169 = vunpack.c.l.b16 %v70
    %v170 = vpack.c.b16 %v167, %v166
    %v171 = vpack.c.b16 %v169, %v168
    %vm174 = vcmask 261120
    %v176 = vsel %vm174, %v161, 0
    %178 = vmatpush.bf16.msra.mxu0 0
    %179 = vmatpush.bf16.msra.mxu0 0
    %180 = vmatpush.bf16.msra.mxu0 0
    %181 = vmatpush.bf16.msra.mxu0 0
    %182 = vmatpush.bf16.msra.mxu0 0
    %183 = vmatpush.bf16.msra.mxu0 0
    %184 = vmatpush.bf16.msra.mxu0 %v171
    %185 = vmatpush.bf16.msra.mxu0 %v170
    %186 = vmatmul.bf16.gmra.mxu0 %v176
    %v187 = vpop.f32.mrf.mxu0
    %v188 = vadd.f32 %v153, %v187
    %v189 = vpop.f32.mrf.mxu0
    %v190 = vadd.f32 %v155, %v189
    %191 = vdwg.mxu0
    %v192 = vld [vmem:[%s4] sm:$0x1]
    %v194 = vperm.slane %v192, 0
    %v196 = vadd.f32 %v188, %v194
    %v197 = vadd.f32 %v190, %v194
    %v198 = vmul.f32 %v196, 0.2
    %v199 = vmul.f32 %v197, 0.2
    %v200 = vmax.f32 %v196, %v198
    %v201 = vmax.f32 %v197, %v199
    %v202 = vpack.c.bf16 %v201, %v200
    %v203 = vld [vmem:[%s5] sm:$0xf]
    %v204 = vld [vmem:[%s5 + $0x4] sm:$0xf]
    %v205 = vld [vmem:[%s5 + $0x8] sm:$0xf]
    %v206 = vld [vmem:[%s5 + $0xc] sm:$0xf]
    %v207 = vld [vmem:[%s5 + $0x10] sm:$0xf]
    %v208 = vld [vmem:[%s5 + $0x14] sm:$0xf]
    %v209 = vld [vmem:[%s5 + $0x18] sm:$0xf]
    %v210 = vld [vmem:[%s5 + $0x1c] sm:$0xf]
    %v211 = vld [vmem:[%s5 + $0x20] sm:$0xf]
    %v212 = vld [vmem:[%s5 + $0x24] sm:$0xf]
    %v213 = vld [vmem:[%s5 + $0x28] sm:$0xf]
    %v214 = vld [vmem:[%s5 + $0x2c] sm:$0xf]
    %v215 = vld [vmem:[%s5 + $0x30] sm:$0xf]
    %v216 = vld [vmem:[%s5 + $0x34] sm:$0xf]
    %v217 = vld [vmem:[%s5 + $0x38] sm:$0xf]
    %v218 = vld [vmem:[%s5 + $0x3c] sm:$0xf]
    %v219 = vld [vmem:[%s6] sm:$0x1]
    %v221 = vperm.slane %v219, 0
    %v239 = vunpack.c.l.b16 %v203
    %v240 = vunpack.c.l.b16 %v204
    %v241 = vunpack.c.l.b16 %v205
    %v242 = vunpack.c.l.b16 %v206
    %v243 = vunpack.c.l.b16 %v207
    %v244 = vunpack.c.l.b16 %v208
    %v245 = vunpack.c.l.b16 %v209
    %v246 = vunpack.c.l.b16 %v210
    %v247 = vunpack.c.l.b16 %v211
    %v248 = vunpack.c.l.b16 %v212
    %v249 = vunpack.c.l.b16 %v213
    %v250 = vunpack.c.l.b16 %v214
    %v251 = vunpack.c.l.b16 %v215
    %v252 = vunpack.c.l.b16 %v216
    %v253 = vunpack.c.l.b16 %v217
    %v254 = vunpack.c.l.b16 %v218
    %v255 = vpack.c.b16 %v240, %v239
    %v256 = vpack.c.b16 %v242, %v241
    %v257 = vpack.c.b16 %v244, %v243
    %v258 = vpack.c.b16 %v246, %v245
    %v259 = vpack.c.b16 %v248, %v247
    %v260 = vpack.c.b16 %v250, %v249
    %v261 = vpack.c.b16 %v252, %v251
    %v262 = vpack.c.b16 %v254, %v253
    %271 = vmatpush.bf16.msra.mxu0 %v262
    %272 = vmatpush.bf16.msra.mxu0 %v261
    %273 = vmatpush.bf16.msra.mxu0 %v260
    %274 = vmatpush.bf16.msra.mxu0 %v259
    %275 = vmatpush.bf16.msra.mxu0 %v258
    %276 = vmatpush.bf16.msra.mxu0 %v257
    %277 = vmatpush.bf16.msra.mxu0 %v256
    %278 = vmatpush.bf16.msra.mxu0 %v255
    %279 = vmatmul.bf16.gmra.mxu0 %v202
    %v280 = vpop.f32.mrf.mxu0
    %v281 = vadd.f32 %v221, %v280
    %v282 = vpop.f32.mrf.mxu0
    %v283 = vadd.f32 %v221, %v282
    %284 = vdwg.mxu0
    %v285 = vmul.f32 %v281, 0.2
    %v286 = vmul.f32 %v283, 0.2
    %v287 = vmax.f32 %v281, %v285
    %v288 = vmax.f32 %v283, %v286
    %v289 = vpack.c.bf16 %v288, %v287
    %v290 = vld [vmem:[%s7] sm:$0xf]
    %v291 = vld [vmem:[%s7 + $0x4] sm:$0xf]
    %v292 = vld [vmem:[%s7 + $0x8] sm:$0xf]
    %v293 = vld [vmem:[%s7 + $0xc] sm:$0xf]
    %v294 = vld [vmem:[%s8] sm:$0x1]
    %v296 = vperm.slane %v294, 0
    %v302 = vunpack.c.l.b16 %v290
    %v303 = vunpack.c.l.b16 %v291
    %v304 = vunpack.c.l.b16 %v292
    %v305 = vunpack.c.l.b16 %v293
    %v306 = vpack.c.b16 %v303, %v302
    %v307 = vpack.c.b16 %v305, %v304
    %v311 = vsel %vm174, %v289, 0
    %313 = vmatpush.bf16.msra.mxu0 0
    %314 = vmatpush.bf16.msra.mxu0 0
    %315 = vmatpush.bf16.msra.mxu0 0
    %316 = vmatpush.bf16.msra.mxu0 0
    %317 = vmatpush.bf16.msra.mxu0 0
    %318 = vmatpush.bf16.msra.mxu0 0
    %319 = vmatpush.bf16.msra.mxu0 %v307
    %320 = vmatpush.bf16.msra.mxu0 %v306
    %321 = vmatmul.bf16.gmra.mxu0 %v311
    %v322 = vpop.f32.mrf.mxu0
    %v323 = vadd.f32 %v296, %v322
    %v324 = vpop.f32.mrf.mxu0
    %v325 = vadd.f32 %v296, %v324
    %326 = vdwg.mxu0
    %vm327 = vcmask 64512
    %328 = vst.msk [vmem:[%s9] sm:$0xff] %vm327, %v323
    %329 = vst.msk [vmem:[%s9 + $0x8] sm:$0xff] %vm327, %v325
    // Predicated region
    $region46: #{tpu_custom_call.1} parent=1 // pred_check
      _
    $region47: #{tpu_custom_call.1} parent=1 // pred_check_branch
      %331 = sbr.rel (0) target = $region49
    $region48: #{tpu_custom_call.1} parent=1 // pred_region
      _
    $region49: #{tpu_custom_call.1} parent=1 // pred_fallthru
      _
    // Predicated region
    $region50: #{tpu_custom_call.1} parent=1 // pred_check
      _
    $region51: #{tpu_custom_call.1} parent=1 // pred_check_branch
      %333 = sbr.rel (0) target = $region53
    $region52: #{tpu_custom_call.1} parent=1 // pred_region
      _
    $region53: #{tpu_custom_call.1} parent=1 // pred_fallthru
      _
    %334 = vsyncpa [#allocation3], 1
    %335 = vsyncpa [#allocation5], 1

</llo_original>
